<compile_context>
chip_gen: v6e
topology: v6e:2x2x1
jax: 0.10.0
libtpu: 0.0.40
codegen_flags: <defaults>
</compile_context>

<pallas_src>
import functools

import jax
import jax.numpy as jnp
from jax import lax
from jax.experimental import pallas as pl
from jax.experimental.pallas import tpu as pltpu


def _softplus(z):
    # numerically stable softplus = log(1 + exp(z)); exp/log1p use the EUP slot.
    return jnp.maximum(z, 0.0) + jnp.log1p(jnp.exp(-jnp.abs(z)))


def _disc_loss_kernel(noise_ref, x_ref,
                      gw1_ref, gb1_ref, gw2_ref, gb2_ref,
                      dw1_ref, db1_ref, dw2t_ref, db2_ref,
                      out_ref, acc_ref,
                      *, total_batch, use_bf16):
    i = pl.program_id(0)
    nsteps = pl.num_programs(0)

    @pl.when(i == 0)
    def _():
        acc_ref[0] = jnp.float32(0.0)

    def mm(a, b):
        # Weights are already bf16 (cast once in the wrapper) when use_bf16;
        # only the activation operand is cast here.
        if use_bf16:
            a = a.astype(jnp.bfloat16)
        return jnp.dot(a, b, preferred_element_type=jnp.float32)

    # ---- generator forward: noise tile -> fake image tile ----
    h = jnp.maximum(mm(noise_ref[...], gw1_ref[...]) + gb1_ref[...], 0.0)   # ReLU
    gen_out = jax.nn.sigmoid(mm(h, gw2_ref[...]) + gb2_ref[...])            # (TB, D)
    # TODO(synk): PyTorch .detach() is a forward no-op; wrap gen_out in
    # lax.stop_gradient if this kernel is ever differentiated w.r.t. gen params.

    # ---- fused discriminator pass over [fake ; real] (single dw1 matmul) ----
    both = jnp.concatenate([gen_out, x_ref[...].astype(jnp.float32)], axis=0)  # (2*TB, D)
    dh = mm(both, dw1_ref[...]) + db1_ref[...]
    dh = jnp.where(dh > 0.0, dh, 0.2 * dh)                                   # LeakyReLU(0.2)

    # Final (DH -> 1) layer on the VPU: elementwise mul + lane reduction.
    logits = jnp.sum(dh * dw2t_ref[...], axis=-1, keepdims=True) + db2_ref[...]  # (2*TB, 1)

    # BCE-with-logits: fake rows (target 0) -> softplus(z); real rows (target 1)
    # -> softplus(-z).  Flip the sign of the real half and run softplus once.
    tb = noise_ref.shape[0]
    row = lax.broadcasted_iota(jnp.int32, logits.shape, 0)
    signed = jnp.where(row < tb, logits, -logits)
    partial = jnp.sum(_softplus(signed))
    acc_ref[0] = acc_ref[0] + partial

    @pl.when(i == nsteps - 1)
    def _():
        # (mean_fake + mean_real) / 2 == (sum_fake + sum_real) / (2 * B)
        out_ref[0] = acc_ref[0] / jnp.float32(2 * total_batch)


def basic_disc_loss(noise, x, params, *, batch_tile=None, use_bf16=False):
    """Pallas-fused BasicDiscLoss.forward. Returns scalar loss (float32)."""
    gw1, gb1, gw2, gb2, dw1, db1, dw2, db2 = params
    B, Z = noise.shape
    B2, D = x.shape
    assert B == B2
    DH = dw1.shape[1]
    # Generator output shape must match x shape (the module's assert).
    assert gw2.shape[1] == D, (
        "Generator output shape does not match input shape. "
        "Please check model input size in config."
    )

    # Pre-transpose the (DH, 1) output weight to a lane-dense (1, DH) row so the
    # kernel can do a VPU multiply + lane reduction instead of an N=1 matmul.
    dw2_t = dw2.reshape(1, DH)

    # Cast matmul weights once on the host side when running bf16 MXU inputs
    # (accumulation stays f32).  Biases / dw2_t stay f32 for accuracy.
    if use_bf16:
        gw1 = gw1.astype(jnp.bfloat16)
        gw2 = gw2.astype(jnp.bfloat16)
        dw1 = dw1.astype(jnp.bfloat16)

    # Batch tile: largest multiple-of-8 tile (<= 512 rows) that evenly divides B.
    # (On v7x, with its 64 MiB VMEM, keep this modest so double-buffering of the
    # noise/x/activation tiles plus the resident weights stays well under limit.)
    if batch_tile is None:
        batch_tile = B
        for cand in (512, 256, 128, 64, 32, 16, 8):
            if B % cand == 0:
                batch_tile = cand
                break
    batch_tile = min(batch_tile, B)
    assert B % batch_tile == 0
    num_tiles = B // batch_tile

    kernel = functools.partial(_disc_loss_kernel, total_batch=B, use_bf16=use_bf16)

    def full_block(shape):
        # Weights/biases: full-array block, constant block index -> VMEM-resident
        # across the whole grid (no per-step re-DMA).  `shape` is bound per call
        # (no late-binding closure bug).
        return pl.BlockSpec(shape, lambda i, n=len(shape): (0,) * n)

    in_specs = [
        pl.BlockSpec((batch_tile, Z), lambda i: (i, 0)),   # noise rows
        pl.BlockSpec((batch_tile, D), lambda i: (i, 0)),   # real-image rows
        full_block(gw1.shape), full_block(gb1.shape),
        full_block(gw2.shape), full_block(gb2.shape),
        full_block(dw1.shape), full_block(db1.shape),
        full_block(dw2_t.shape), full_block(db2.shape),
    ]

    out = pl.pallas_call(
        kernel,
        out_shape=jax.ShapeDtypeStruct((1,), jnp.float32),
        grid_spec=pltpu.PrefetchScalarGridSpec(
            num_scalar_prefetch=0,
            grid=(num_tiles,),
            in_specs=in_specs,
            # Scalar result lives in SMEM (no lane-sparse VMEM tile + padded DMA).
            out_specs=pl.BlockSpec(memory_space=pltpu.MemorySpace.SMEM),
            scratch_shapes=[pltpu.SMEM((1,), jnp.float32)],   # running loss sum
        ),
        compiler_params=pltpu.CompilerParams(
            # The batch grid axis carries the SMEM accumulator -> "arbitrary".
            # TODO(synk): on v7x (2 TCs) split the reduction into per-core
            # partial sums so this axis could be marked "parallel".
            dimension_semantics=("arbitrary",),
            vmem_limit_bytes=48 << 20,   # headroom below v7x's 64 MiB VMEM
        ),
    )(noise, x, gw1, gb1, gw2, gb2, dw1, db1, dw2_t, db2)
    return out[0]


def _reference(noise, x, params):
    gw1, gb1, gw2, gb2, dw1, db1, dw2, db2 = params
    h = jnp.maximum(noise @ gw1 + gb1, 0.0)
    gen_out = jax.nn.sigmoid(h @ gw2 + gb2)

    def disc(inp):
        dh = inp @ dw1 + db1
        dh = jnp.where(dh > 0.0, dh, 0.2 * dh)
        return dh @ dw2 + db2

    fp = disc(gen_out)
    rp = disc(x)
    fake = jnp.mean(jnp.maximum(fp, 0.0) + jnp.log1p(jnp.exp(-jnp.abs(fp))))
    real = jnp.mean(jnp.maximum(-rp, 0.0) + jnp.log1p(jnp.exp(-jnp.abs(rp))))
    return (fake + real) * 0.5


if __name__ == "__main__":
    key = jax.random.PRNGKey(0)
    B, Z, GH, D, DH = 8, 32, 32, 64, 32   # batch, z_dim, gen hidden, im_dim, disc hidden

    keys = jax.random.split(key, 10)
    # Deterministic synthetic parameters (no checkpoint loading).
    gw1 = jax.random.normal(keys[0], (Z, GH), jnp.float32) * 0.1
    gb1 = jnp.zeros((1, GH), jnp.float32)
    gw2 = jax.random.normal(keys[1], (GH, D), jnp.float32) * 0.1
    gb2 = jnp.zeros((1, D), jnp.float32)
    dw1 = jax.random.normal(keys[2], (D, DH), jnp.float32) * 0.1
    db1 = jnp.zeros((1, DH), jnp.float32)
    dw2 = jax.random.normal(keys[3], (DH, 1), jnp.float32) * 0.1
    db2 = jnp.zeros((1, 1), jnp.float32)
    params = (gw1, gb1, gw2, gb2, dw1, db1, dw2, db2)

    # create_noise(batch_size, input_dim)  (torch.randn equivalent, deterministic)
    # TODO(synk): noise could instead be generated in-kernel via pltpu.prng_seed +
    # pltpu.stateful_normal to skip the HBM noise DMA entirely, at the cost of
    # bit-exact comparability with the pure-JAX reference.
    noise = jax.random.normal(keys[4], (B, Z), jnp.float32)
    # real images, flattened to (B, D)
    x = jax.nn.sigmoid(jax.random.normal(keys[5], (B, D), jnp.float32))

    loss = jax.block_until_ready(basic_disc_loss(noise, x, params))
    ref = jax.block_until_ready(_reference(noise, x, params))
    assert jnp.allclose(loss, ref, atol=1e-5, rtol=1e-5), (loss, ref)
    print("KERNEL_OK")
</pallas_src>

<mosaic_0001>
module attributes {stable_mosaic.version = 11 : i64} {
  func.func @_disc_loss_kernel(%arg0: i32, %arg1: memref<8x32xf32, #tpu.memory_space<vmem>>, %arg2: memref<8x64xf32, #tpu.memory_space<vmem>>, %arg3: memref<32x32xf32, #tpu.memory_space<vmem>>, %arg4: memref<1x32xf32, #tpu.memory_space<vmem>>, %arg5: memref<32x64xf32, #tpu.memory_space<vmem>>, %arg6: memref<1x64xf32, #tpu.memory_space<vmem>>, %arg7: memref<64x32xf32, #tpu.memory_space<vmem>>, %arg8: memref<1x32xf32, #tpu.memory_space<vmem>>, %arg9: memref<1x32xf32, #tpu.memory_space<vmem>>, %arg10: memref<1x1xf32, #tpu.memory_space<vmem>>, %arg11: memref<1xf32, #tpu.memory_space<smem>>, %arg12: memref<1xf32, #tpu.memory_space<smem>>) attributes {dimension_semantics = [#tpu.dimension_semantics<arbitrary>], iteration_bounds = array<i64: 1>, scalar_prefetch = 0 : i64, scratch_operands = 1 : i64, tpu.core_type = #tpu.core_type<tc>, window_params = [{transform_indices = @transform_0, window_bounds = array<i64: 8, 32>}, {transform_indices = @transform_1, window_bounds = array<i64: 8, 64>}, {pipeline_mode = #tpu.pipeline_mode<synchronous>, transform_indices = @transform_2, window_bounds = array<i64: 32, 32>}, {pipeline_mode = #tpu.pipeline_mode<synchronous>, transform_indices = @transform_3, window_bounds = array<i64: 1, 32>}, {pipeline_mode = #tpu.pipeline_mode<synchronous>, transform_indices = @transform_4, window_bounds = array<i64: 32, 64>}, {pipeline_mode = #tpu.pipeline_mode<synchronous>, transform_indices = @transform_5, window_bounds = array<i64: 1, 64>}, {pipeline_mode = #tpu.pipeline_mode<synchronous>, transform_indices = @transform_6, window_bounds = array<i64: 64, 32>}, {pipeline_mode = #tpu.pipeline_mode<synchronous>, transform_indices = @transform_7, window_bounds = array<i64: 1, 32>}, {pipeline_mode = #tpu.pipeline_mode<synchronous>, transform_indices = @transform_8, window_bounds = array<i64: 1, 32>}, {pipeline_mode = #tpu.pipeline_mode<synchronous>, transform_indices = @transform_9, window_bounds = array<i64: 1, 1>}, {transform_indices = @transform_10, window_bounds = array<i64: 1>}]} {
    %c0_i32 = arith.constant 0 : i32
    %0 = arith.cmpi eq, %arg0, %c0_i32 : i32
    %1 = arith.extui %0 : i1 to i32
    %c0_i32_0 = arith.constant 0 : i32
    %2 = arith.cmpi ne, %1, %c0_i32_0 : i32
    scf.if %2 {
      %cst_35 = arith.constant 0.000000e+00 : f32
      %c0_36 = arith.constant 0 : index
      %65 = memref.load %arg12[%c0_36] : memref<1xf32, #tpu.memory_space<smem>>
      memref.store %cst_35, %arg12[%c0_36] : memref<1xf32, #tpu.memory_space<smem>>
    } else {
    }
    %c0 = arith.constant 0 : index
    %c0_1 = arith.constant 0 : index
    %3 = vector.load %arg1[%c0, %c0_1] : memref<8x32xf32, #tpu.memory_space<vmem>>, vector<8x32xf32>
    %c0_2 = arith.constant 0 : index
    %c0_3 = arith.constant 0 : index
    %4 = vector.load %arg3[%c0_2, %c0_3] : memref<32x32xf32, #tpu.memory_space<vmem>>, vector<32x32xf32>
    %cst = arith.constant dense<0.000000e+00> : vector<8x32xf32>
    %5 = tpu.matmul %3, %4, %cst {dimension_numbers = #tpu.dot_dimension_numbers<[1], [0], [0], [1], [0, 0, 1, 1], [], []>} : vector<8x32xf32>, vector<32x32xf32>, vector<8x32xf32> -> vector<8x32xf32>
    %c0_4 = arith.constant 0 : index
    %c0_5 = arith.constant 0 : index
    %6 = vector.load %arg4[%c0_4, %c0_5] : memref<1x32xf32, #tpu.memory_space<vmem>>, vector<1x32xf32>
    %7 = vector.broadcast %6 : vector<1x32xf32> to vector<8x32xf32>
    %8 = arith.addf %5, %7 : vector<8x32xf32>
    %cst_6 = arith.constant 0.000000e+00 : f32
    %9 = vector.broadcast %cst_6 : f32 to vector<8x32xf32>
    %10 = arith.maximumf %8, %9 : vector<8x32xf32>
    %c0_7 = arith.constant 0 : index
    %c0_8 = arith.constant 0 : index
    %11 = vector.load %arg5[%c0_7, %c0_8] : memref<32x64xf32, #tpu.memory_space<vmem>>, vector<32x64xf32>
    %cst_9 = arith.constant dense<0.000000e+00> : vector<8x64xf32>
    %12 = tpu.matmul %10, %11, %cst_9 {dimension_numbers = #tpu.dot_dimension_numbers<[1], [0], [0], [1], [0, 0, 1, 1], [], []>} : vector<8x32xf32>, vector<32x64xf32>, vector<8x64xf32> -> vector<8x64xf32>
    %c0_10 = arith.constant 0 : index
    %c0_11 = arith.constant 0 : index
    %13 = vector.load %arg6[%c0_10, %c0_11] : memref<1x64xf32, #tpu.memory_space<vmem>>, vector<1x64xf32>
    %14 = vector.broadcast %13 : vector<1x64xf32> to vector<8x64xf32>
    %15 = arith.addf %12, %14 : vector<8x64xf32>
    %16 = arith.negf %15 : vector<8x64xf32>
    %17 = math.exp %16 : vector<8x64xf32>
    %cst_12 = arith.constant 1.000000e+00 : f32
    %18 = vector.broadcast %cst_12 : f32 to vector<8x64xf32>
    %19 = arith.addf %18, %17 : vector<8x64xf32>
    %20 = arith.divf %18, %19 : vector<8x64xf32>
    %c0_13 = arith.constant 0 : index
    %c0_14 = arith.constant 0 : index
    %21 = vector.load %arg2[%c0_13, %c0_14] : memref<8x64xf32, #tpu.memory_space<vmem>>, vector<8x64xf32>
    %22 = tpu.concatenate %20, %21 in 0 : vector<8x64xf32>, vector<8x64xf32> -> vector<16x64xf32>
    %c0_15 = arith.constant 0 : index
    %c0_16 = arith.constant 0 : index
    %23 = vector.load %arg7[%c0_15, %c0_16] : memref<64x32xf32, #tpu.memory_space<vmem>>, vector<64x32xf32>
    %cst_17 = arith.constant dense<0.000000e+00> : vector<16x32xf32>
    %24 = tpu.matmul %22, %23, %cst_17 {dimension_numbers = #tpu.dot_dimension_numbers<[1], [0], [0], [1], [0, 0, 1, 1], [], []>} : vector<16x64xf32>, vector<64x32xf32>, vector<16x32xf32> -> vector<16x32xf32>
    %c0_18 = arith.constant 0 : index
    %c0_19 = arith.constant 0 : index
    %25 = vector.load %arg8[%c0_18, %c0_19] : memref<1x32xf32, #tpu.memory_space<vmem>>, vector<1x32xf32>
    %26 = vector.broadcast %25 : vector<1x32xf32> to vector<16x32xf32>
    %27 = arith.addf %24, %26 : vector<16x32xf32>
    %cst_20 = arith.constant 0.000000e+00 : f32
    %28 = vector.broadcast %cst_20 : f32 to vector<16x32xf32>
    %29 = arith.cmpf ogt, %27, %28 : vector<16x32xf32>
    %cst_21 = arith.constant 2.000000e-01 : f32
    %30 = vector.broadcast %cst_21 : f32 to vector<16x32xf32>
    %31 = arith.mulf %30, %27 : vector<16x32xf32>
    %32 = arith.select %29, %27, %31 : vector<16x32xi1>, vector<16x32xf32>
    %c0_22 = arith.constant 0 : index
    %c0_23 = arith.constant 0 : index
    %33 = vector.load %arg9[%c0_22, %c0_23] : memref<1x32xf32, #tpu.memory_space<vmem>>, vector<1x32xf32>
    %34 = vector.broadcast %33 : vector<1x32xf32> to vector<16x32xf32>
    %35 = arith.mulf %32, %34 : vector<16x32xf32>
    %cst_24 = arith.constant dense<0.000000e+00> : vector<16xf32>
    %36 = vector.multi_reduction <add>, %35, %cst_24 [1] : vector<16x32xf32> to vector<16xf32>
    %37 = vector.shape_cast %36 : vector<16xf32> to vector<16x1xf32>
    %c0_25 = arith.constant 0 : index
    %c0_26 = arith.constant 0 : index
    %38 = vector.load %arg10[%c0_25, %c0_26] : memref<1x1xf32, #tpu.memory_space<vmem>>, vector<1x1xf32>
    %39 = vector.broadcast %38 : vector<1x1xf32> to vector<16x1xf32>
    %40 = arith.addf %37, %39 : vector<16x1xf32>
    %41 = tpu.iota {dimensions = array<i32: 0>} : vector<16x1xi32>
    %c8_i32 = arith.constant 8 : i32
    %42 = vector.broadcast %c8_i32 : i32 to vector<16x1xi32>
    %43 = arith.cmpi slt, %41, %42 : vector<16x1xi32>
    %cst_27 = arith.constant 0.000000e+00 : f32
    %44 = vector.broadcast %cst_27 : f32 to vector<16x1xf32>
    %45 = arith.subf %44, %40 : vector<16x1xf32>
    %46 = arith.select %43, %40, %45 : vector<16x1xi1>, vector<16x1xf32>
    %cst_28 = arith.constant 0.000000e+00 : f32
    %47 = vector.broadcast %cst_28 : f32 to vector<16x1xf32>
    %48 = arith.maximumf %46, %47 : vector<16x1xf32>
    %49 = math.absf %46 : vector<16x1xf32>
    %cst_29 = arith.constant 0.000000e+00 : f32
    %50 = vector.broadcast %cst_29 : f32 to vector<16x1xf32>
    %51 = arith.subf %50, %49 : vector<16x1xf32>
    %52 = math.exp %51 : vector<16x1xf32>
    %53 = math.log1p %52 : vector<16x1xf32>
    %54 = arith.addf %48, %53 : vector<16x1xf32>
    %55 = vector.shape_cast %54 : vector<16x1xf32> to vector<1x16x1xf32>
    %cst_30 = arith.constant dense<0.000000e+00> : vector<1xf32>
    %56 = vector.multi_reduction <add>, %55, %cst_30 [1, 2] : vector<1x16x1xf32> to vector<1xf32>
    %57 = vector.shape_cast %56 : vector<1xf32> to vector<1x1x1xf32>
    %58 = vector.extract %57[0, 0, 0] : f32 from vector<1x1x1xf32>
    %c0_31 = arith.constant 0 : index
    %59 = memref.load %arg12[%c0_31] : memref<1xf32, #tpu.memory_space<smem>>
    %60 = arith.addf %59, %58 : f32
    %c0_32 = arith.constant 0 : index
    %61 = memref.load %arg12[%c0_32] : memref<1xf32, #tpu.memory_space<smem>>
    memref.store %60, %arg12[%c0_32] : memref<1xf32, #tpu.memory_space<smem>>
    %c0_i32_33 = arith.constant 0 : i32
    %62 = arith.cmpi eq, %arg0, %c0_i32_33 : i32
    %63 = arith.extui %62 : i1 to i32
    %c0_i32_34 = arith.constant 0 : i32
    %64 = arith.cmpi ne, %63, %c0_i32_34 : i32
    scf.if %64 {
      %c0_35 = arith.constant 0 : index
      %65 = memref.load %arg12[%c0_35] : memref<1xf32, #tpu.memory_space<smem>>
      %cst_36 = arith.constant 1.600000e+01 : f32
      %66 = arith.divf %65, %cst_36 : f32
      %c0_37 = arith.constant 0 : index
      %67 = memref.load %arg11[%c0_37] : memref<1xf32, #tpu.memory_space<smem>>
      memref.store %66, %arg11[%c0_37] : memref<1xf32, #tpu.memory_space<smem>>
    } else {
    }
    return
  }
  func.func @transform_0(%arg0: i32) -> (i32, i32) {
    %c0_i32 = arith.constant 0 : i32
    %c0_i32_0 = arith.constant 0 : i32
    return %arg0, %c0_i32 : i32, i32
  }
  func.func @transform_1(%arg0: i32) -> (i32, i32) {
    %c0_i32 = arith.constant 0 : i32
    %c0_i32_0 = arith.constant 0 : i32
    return %arg0, %c0_i32 : i32, i32
  }
  func.func @transform_2(%arg0: i32) -> (i32, i32) {
    %c0_i32 = arith.constant 0 : i32
    %c0_i32_0 = arith.constant 0 : i32
    %c0_i32_1 = arith.constant 0 : i32
    return %c0_i32, %c0_i32_0 : i32, i32
  }
  func.func @transform_3(%arg0: i32) -> (i32, i32) {
    %c0_i32 = arith.constant 0 : i32
    %c0_i32_0 = arith.constant 0 : i32
    %c0_i32_1 = arith.constant 0 : i32
    return %c0_i32, %c0_i32_0 : i32, i32
  }
  func.func @transform_4(%arg0: i32) -> (i32, i32) {
    %c0_i32 = arith.constant 0 : i32
    %c0_i32_0 = arith.constant 0 : i32
    %c0_i32_1 = arith.constant 0 : i32
    return %c0_i32, %c0_i32_0 : i32, i32
  }
  func.func @transform_5(%arg0: i32) -> (i32, i32) {
    %c0_i32 = arith.constant 0 : i32
    %c0_i32_0 = arith.constant 0 : i32
    %c0_i32_1 = arith.constant 0 : i32
    return %c0_i32, %c0_i32_0 : i32, i32
  }
  func.func @transform_6(%arg0: i32) -> (i32, i32) {
    %c0_i32 = arith.constant 0 : i32
    %c0_i32_0 = arith.constant 0 : i32
    %c0_i32_1 = arith.constant 0 : i32
    return %c0_i32, %c0_i32_0 : i32, i32
  }
  func.func @transform_7(%arg0: i32) -> (i32, i32) {
    %c0_i32 = arith.constant 0 : i32
    %c0_i32_0 = arith.constant 0 : i32
    %c0_i32_1 = arith.constant 0 : i32
    return %c0_i32, %c0_i32_0 : i32, i32
  }
  func.func @transform_8(%arg0: i32) -> (i32, i32) {
    %c0_i32 = arith.constant 0 : i32
    %c0_i32_0 = arith.constant 0 : i32
    %c0_i32_1 = arith.constant 0 : i32
    return %c0_i32, %c0_i32_0 : i32, i32
  }
  func.func @transform_9(%arg0: i32) -> (i32, i32) {
    %c0_i32 = arith.constant 0 : i32
    %c0_i32_0 = arith.constant 0 : i32
    %c0_i32_1 = arith.constant 0 : i32
    return %c0_i32, %c0_i32_0 : i32, i32
  }
  func.func @transform_10(%arg0: i32) -> i32 {
    %c0_i32 = arith.constant 0 : i32
    %c0_i32_0 = arith.constant 0 : i32
    return %c0_i32 : i32
  }
}

</mosaic_0001>

<llo_original>
// kernel: tpu_custom_call.1
$region0: #{tpu_custom_call.1}
  #allocation0 [shape = 'u32[]', space=smem, size = 0x4, offset = 0x4, fixed_abs, tag = 'smem constant byte address 0x4 - core index']
  #allocation1 [shape = 'u32[144,128]{1,0:T(1,128)}', space=vmem, size = 0x12000, scoped, tag = 'internal scratch']
  #allocation2 [shape = 'f32[1]{0:T(128)}', space=smem, size = 0x200, scoped, tag = 'scratch operand']
  #allocation3 [shape = 'f32[1,1]{1,0:T(1,128)S(1)}', space=vmem, size = 0x200, scoped, tag = 'scoped memory for tpu_custom_call.1']
  %s0 = inlined_call_operand.vmem [shape: f32[8,32], index: 0, kind: input, shape index: {}]
  %s1 = inlined_call_operand.vmem [shape: f32[8,64], index: 1, kind: input, shape index: {}]
  %s2 = inlined_call_operand.vmem [shape: f32[32,32], index: 2, kind: input, shape index: {}]
  %s3 = inlined_call_operand.vmem [shape: f32[1,32], index: 3, kind: input, shape index: {}]
  %s4 = inlined_call_operand.vmem [shape: f32[32,64], index: 4, kind: input, shape index: {}]
  %s5 = inlined_call_operand.vmem [shape: f32[1,64], index: 5, kind: input, shape index: {}]
  %s6 = inlined_call_operand.vmem [shape: f32[64,32], index: 6, kind: input, shape index: {}]
  %s7 = inlined_call_operand.vmem [shape: f32[1,32], index: 7, kind: input, shape index: {}]
  %s8 = inlined_call_operand.vmem [shape: f32[1,32], index: 8, kind: input, shape index: {}]
  %s9 = inlined_call_operand.<no memory space> [shape: f32[1,1], index: 9, kind: input, shape index: {}]
  %s10 = inlined_call_operand.hbm [shape: f32[1], index: 10, kind: output, shape index: {}]
  %s11 = sld [smem:[#allocation0]]
  $region58: #{tpu_custom_call.1} parent=0
    _
  %s13 = ssub.s32 1, %s11
  %s14 = scalar_select 0, %s13, %s11
  %v15 = vstv %s9
  %16 = vst [vmem:[#allocation3] sm:$0x1] %v15
  $region1: #{tpu_custom_call.1} parent=0
    #allocation4 [shape = 'u8[512]{0}', space=smem, size = 0x200, scoped, tag = 'output window, operand 0, single buffered']
    #allocation5 [shape = 's32[1]{0}', space=sflag, size = 0x4, scoped, tag = 'scoped memory for tpu_custom_call.1']
    %17 = vsyncpa [#allocation5], 0
    // Predicated region
    $region2: #{tpu_custom_call.1} parent=1 // pred_check
      _
    $region3: #{tpu_custom_call.1} parent=1 // pred_check_branch
      %19 = sbr.rel (0) target = $region5
    $region4: #{tpu_custom_call.1} parent=1 // pred_region
      _
    $region5: #{tpu_custom_call.1} parent=1 // pred_fallthru
      _
    // Predicated region
    $region6: #{tpu_custom_call.1} parent=1 // pred_check
      _
    $region7: #{tpu_custom_call.1} parent=1 // pred_check_branch
      %21 = sbr.rel (0) target = $region9
    $region8: #{tpu_custom_call.1} parent=1 // pred_region
      _
    $region9: #{tpu_custom_call.1} parent=1 // pred_fallthru
      _
    // Predicated region
    $region10: #{tpu_custom_call.1} parent=1 // pred_check
      _
    $region11: #{tpu_custom_call.1} parent=1 // pred_check_branch
      %23 = sbr.rel (0) target = $region13
    $region12: #{tpu_custom_call.1} parent=1 // pred_region
      _
    $region13: #{tpu_custom_call.1} parent=1 // pred_fallthru
      _
    // Predicated region
    $region14: #{tpu_custom_call.1} parent=1 // pred_check
      _
    $region15: #{tpu_custom_call.1} parent=1 // pred_check_branch
      %25 = sbr.rel (0) target = $region17
    $region16: #{tpu_custom_call.1} parent=1 // pred_region
      _
    $region17: #{tpu_custom_call.1} parent=1 // pred_fallthru
      _
    // Predicated region
    $region18: #{tpu_custom_call.1} parent=1 // pred_check
      _
    $region19: #{tpu_custom_call.1} parent=1 // pred_check_branch
      %27 = sbr.rel (0) target = $region21
    $region20: #{tpu_custom_call.1} parent=1 // pred_region
      _
    $region21: #{tpu_custom_call.1} parent=1 // pred_fallthru
      _
    // Predicated region
    $region22: #{tpu_custom_call.1} parent=1 // pred_check
      _
    $region23: #{tpu_custom_call.1} parent=1 // pred_check_branch
      %29 = sbr.rel (0) target = $region25
    $region24: #{tpu_custom_call.1} parent=1 // pred_region
      _
    $region25: #{tpu_custom_call.1} parent=1 // pred_fallthru
      _
    // Predicated region
    $region26: #{tpu_custom_call.1} parent=1 // pred_check
      _
    $region27: #{tpu_custom_call.1} parent=1 // pred_check_branch
      %31 = sbr.rel (0) target = $region29
    $region28: #{tpu_custom_call.1} parent=1 // pred_region
      _
    $region29: #{tpu_custom_call.1} parent=1 // pred_fallthru
      _
    // Predicated region
    $region30: #{tpu_custom_call.1} parent=1 // pred_check
      _
    $region31: #{tpu_custom_call.1} parent=1 // pred_check_branch
      %33 = sbr.rel (0) target = $region33
    $region32: #{tpu_custom_call.1} parent=1 // pred_region
      _
    $region33: #{tpu_custom_call.1} parent=1 // pred_fallthru
      _
    // Predicated region
    $region34: #{tpu_custom_call.1} parent=1 // pred_check
      _
    $region35: #{tpu_custom_call.1} parent=1 // pred_check_branch
      %35 = sbr.rel (0) target = $region37
    $region36: #{tpu_custom_call.1} parent=1 // pred_region
      _
    $region37: #{tpu_custom_call.1} parent=1 // pred_fallthru
      _
    // Predicated region
    $region38: #{tpu_custom_call.1} parent=1 // pred_check
      _
    $region39: #{tpu_custom_call.1} parent=1 // pred_check_branch
      %37 = sbr.rel (0) target = $region41
    $region40: #{tpu_custom_call.1} parent=1 // pred_region
      _
    $region41: #{tpu_custom_call.1} parent=1 // pred_fallthru
      _
    %p38 = scmp.eq.s32.totalorder 0, 0
    // Predicated region
    $region42: #{tpu_custom_call.1} parent=1 // pred_check
      %p39 = pneg %p38
    $region43: #{tpu_custom_call.1} parent=1 // pred_check_branch
      %41 = sbr.rel (%p39) target = $region45
    $region44: #{tpu_custom_call.1} parent=1 // pred_region
      %s42 = scalar_lea.smem [#allocation2], 0
      %43 = sst [smem:[%s42]] 0.0
    $region45: #{tpu_custom_call.1} parent=1 // pred_fallthru
      _
    %v44 = vld [vmem:[%s0] sm:$0xff]
    %v45 = vld [vmem:[%s2] sm:$0xff]
    %v46 = vld [vmem:[%s2 + $0x8] sm:$0xff]
    %v47 = vld [vmem:[%s2 + $0x10] sm:$0xff]
    %v48 = vld [vmem:[%s2 + $0x18] sm:$0xff]
    %v49 = vld [vmem:[%s3] sm:$0x1]
    %v51 = vlaneseq
    %v52 = vshrl.u32 %v51, 7
    %v53 = vsub.s32 0, %v52
    %v54 = vrot.slane %v49, %v53
    %vm56 = vcmask 261120
    %v58 = vsel %vm56, %v44, 0
    %60 = vmatprep.subr.mxu0 0.0
    %61 = vmatpush1.msra.mxu0 0.0
    %62 = vmatprep.subr.mxu0 0.0
    %63 = vmatpush1.msra.mxu0 0.0
    %64 = vmatprep.subr.mxu0 0.0
    %65 = vmatpush1.msra.mxu0 0.0
    %66 = vmatprep.subr.mxu0 0.0
    %67 = vmatpush1.msra.mxu0 0.0
    %68 = vmatprep.subr.mxu0 0.0
    %69 = vmatpush1.msra.mxu0 0.0
    %70 = vmatprep.subr.mxu0 0.0
    %71 = vmatpush1.msra.mxu0 0.0
    %72 = vmatprep.subr.mxu0 0.0
    %73 = vmatpush1.msra.mxu0 0.0
    %74 = vmatprep.subr.mxu0 0.0
    %75 = vmatpush1.msra.mxu0 0.0
    %76 = vmatprep.subr.mxu0 0.0
    %77 = vmatpush1.msra.mxu0 0.0
    %78 = vmatprep.subr.mxu0 0.0
    %79 = vmatpush1.msra.mxu0 0.0
    %80 = vmatprep.subr.mxu0 0.0
    %81 = vmatpush1.msra.mxu0 0.0
    %82 = vmatprep.subr.mxu0 0.0
    %83 = vmatpush1.msra.mxu0 0.0
    %84 = vmatprep.subr.mxu0 0.0
    %85 = vmatpush1.msra.mxu0 %v48
    %86 = vmatprep.subr.mxu0 0.0
    %87 = vmatpush1.msra.mxu0 %v47
    %88 = vmatprep.subr.mxu0 0.0
    %89 = vmatpush1.msra.mxu0 %v46
    %90 = vmatprep.subr.mxu0 0.0
    %91 = vmatpush1.msra.mxu0 %v45
    %92 = vmatprep.subr.mxu0 0.0
    %93 = vmatpush2.msra.mxu0 0.0
    %94 = vmatprep.subr.mxu0 0.0
    %95 = vmatpush2.msra.mxu0 0.0
    %96 = vmatprep.subr.mxu0 0.0
    %97 = vmatpush2.msra.mxu0 0.0
    %98 = vmatprep.subr.mxu0 0.0
    %99 = vmatpush2.msra.mxu0 0.0
    %100 = vmatprep.subr.mxu0 0.0
    %101 = vmatpush2.msra.mxu0 0.0
    %102 = vmatprep.subr.mxu0 0.0
    %103 = vmatpush2.msra.mxu0 0.0
    %104 = vmatprep.subr.mxu0 0.0
    %105 = vmatpush2.msra.mxu0 0.0
    %106 = vmatprep.subr.mxu0 0.0
    %107 = vmatpush2.msra.mxu0 0.0
    %108 = vmatprep.subr.mxu0 0.0
    %109 = vmatpush2.msra.mxu0 0.0
    %110 = vmatprep.subr.mxu0 0.0
    %111 = vmatpush2.msra.mxu0 0.0
    %112 = vmatprep.subr.mxu0 0.0
    %113 = vmatpush2.msra.mxu0 0.0
    %114 = vmatprep.subr.mxu0 0.0
    %115 = vmatpush2.msra.mxu0 0.0
    %116 = vmatprep.subr.mxu0 0.0
    %117 = vmatpush2.msra.mxu0 0.0
    %118 = vmatprep.subr.mxu0 0.0
    %119 = vmatpush2.msra.mxu0 0.0
    %120 = vmatprep.subr.mxu0 0.0
    %121 = vmatpush2.msra.mxu0 0.0
    %122 = vmatprep.subr.mxu0 0.0
    %123 = vmatpush2.msra.mxu0 0.0
    %124 = vmatprep.mubr.f32.mxu0 0.0
    %125 = vmatmul.mubr.f32.gmra.mxu0 %v58
    %v126 = vpop.f32.mrf.mxu0
    %v127 = vadd.f32 %v54, %v126
    %v128 = vpop.f32.mrf.mxu0
    %129 = vdwg.mxu0
    %v130 = vmax.f32 %v127, 0.0
    %v131 = vld [vmem:[%s4] sm:$0xff]
    %v132 = vld [vmem:[%s4 + $0x8] sm:$0xff]
    %v133 = vld [vmem:[%s4 + $0x10] sm:$0xff]
    %v134 = vld [vmem:[%s4 + $0x18] sm:$0xff]
    %v135 = vld [vmem:[%s5] sm:$0x1]
    %v137 = vlaneseq
    %v138 = vshrl.u32 %v137, 7
    %v139 = vsub.s32 0, %v138
    %v140 = vrot.slane %v135, %v139
    %v143 = vsel %vm56, %v130, 0
    %145 = vmatprep.subr.mxu0 0.0
    %146 = vmatpush1.msra.mxu0 0.0
    %147 = vmatprep.subr.mxu0 0.0
    %148 = vmatpush1.msra.mxu0 0.0
    %149 = vmatprep.subr.mxu0 0.0
    %150 = vmatpush1.msra.mxu0 0.0
    %151 = vmatprep.subr.mxu0 0.0
    %152 = vmatpush1.msra.mxu0 0.0
    %153 = vmatprep.subr.mxu0 0.0
    %154 = vmatpush1.msra.mxu0 0.0
    %155 = vmatprep.subr.mxu0 0.0
    %156 = vmatpush1.msra.mxu0 0.0
    %157 = vmatprep.subr.mxu0 0.0
    %158 = vmatpush1.msra.mxu0 0.0
    %159 = vmatprep.subr.mxu0 0.0
    %160 = vmatpush1.msra.mxu0 0.0
    %161 = vmatprep.subr.mxu0 0.0
    %162 = vmatpush1.msra.mxu0 0.0
    %163 = vmatprep.subr.mxu0 0.0
    %164 = vmatpush1.msra.mxu0 0.0
    %165 = vmatprep.subr.mxu0 0.0
    %166 = vmatpush1.msra.mxu0 0.0
    %167 = vmatprep.subr.mxu0 0.0
    %168 = vmatpush1.msra.mxu0 0.0
    %169 = vmatprep.subr.mxu0 0.0
    %170 = vmatpush1.msra.mxu0 %v134
    %171 = vmatprep.subr.mxu0 0.0
    %172 = vmatpush1.msra.mxu0 %v133
    %173 = vmatprep.subr.mxu0 0.0
    %174 = vmatpush1.msra.mxu0 %v132
    %175 = vmatprep.subr.mxu0 0.0
    %176 = vmatpush1.msra.mxu0 %v131
    %177 = vmatprep.subr.mxu0 0.0
    %178 = vmatpush2.msra.mxu0 0.0
    %179 = vmatprep.subr.mxu0 0.0
    %180 = vmatpush2.msra.mxu0 0.0
    %181 = vmatprep.subr.mxu0 0.0
    %182 = vmatpush2.msra.mxu0 0.0
    %183 = vmatprep.subr.mxu0 0.0
    %184 = vmatpush2.msra.mxu0 0.0
    %185 = vmatprep.subr.mxu0 0.0
    %186 = vmatpush2.msra.mxu0 0.0
    %187 = vmatprep.subr.mxu0 0.0
    %188 = vmatpush2.msra.mxu0 0.0
    %189 = vmatprep.subr.mxu0 0.0
    %190 = vmatpush2.msra.mxu0 0.0
    %191 = vmatprep.subr.mxu0 0.0
    %192 = vmatpush2.msra.mxu0 0.0
    %193 = vmatprep.subr.mxu0 0.0
    %194 = vmatpush2.msra.mxu0 0.0
    %195 = vmatprep.subr.mxu0 0.0
    %196 = vmatpush2.msra.mxu0 0.0
    %197 = vmatprep.subr.mxu0 0.0
    %198 = vmatpush2.msra.mxu0 0.0
    %199 = vmatprep.subr.mxu0 0.0
    %200 = vmatpush2.msra.mxu0 0.0
    %201 = vmatprep.subr.mxu0 0.0
    %202 = vmatpush2.msra.mxu0 0.0
    %203 = vmatprep.subr.mxu0 0.0
    %204 = vmatpush2.msra.mxu0 0.0
    %205 = vmatprep.subr.mxu0 0.0
    %206 = vmatpush2.msra.mxu0 0.0
    %207 = vmatprep.subr.mxu0 0.0
    %208 = vmatpush2.msra.mxu0 0.0
    %209 = vmatprep.mubr.f32.mxu0 0.0
    %210 = vmatmul.mubr.f32.gmra.mxu0 %v143
    %v211 = vpop.f32.mrf.mxu0
    %v212 = vadd.f32 %v140, %v211
    %v213 = vpop.f32.mrf.mxu0
    %214 = vdwg.mxu0
    %v215 = vxor.u32 %v212, 2147483648
    %v216 = vmul.f32 %v215, 1.442695
    %v217 = vpow.pop %v216
    %v218 = vadd.f32 %v217, 1.0
    %v219 = vrcp.pop %v218
    %v220 = vmul.f32 1.0, %v219
    %v221 = vld [vmem:[%s1] sm:$0xff]
    %v222 = vld [vmem:[%s6] sm:$0xff]
    %v223 = vld [vmem:[%s6 + $0x8] sm:$0xff]
    %v224 = vld [vmem:[%s6 + $0x10] sm:$0xff]
    %v225 = vld [vmem:[%s6 + $0x18] sm:$0xff]
    %v226 = vld [vmem:[%s6 + $0x20] sm:$0xff]
    %v227 = vld [vmem:[%s6 + $0x28] sm:$0xff]
    %v228 = vld [vmem:[%s6 + $0x30] sm:$0xff]
    %v229 = vld [vmem:[%s6 + $0x38] sm:$0xff]
    %v230 = vld [vmem:[%s7] sm:$0x1]
    %v232 = vlaneseq
    %v233 = vshrl.u32 %v232, 7
    %v234 = vsub.s32 0, %v233
    %v235 = vrot.slane %v230, %v234
    %vm237 = vcmask 523264
    %v239 = vsel %vm237, %v220, 0
    %v242 = vsel %vm237, %v221, 0
    %244 = vmatprep.subr.mxu0 0.0
    %245 = vmatpush1.msra.mxu0 0.0
    %246 = vmatprep.subr.mxu0 0.0
    %247 = vmatpush1.msra.mxu0 0.0
    %248 = vmatprep.subr.mxu0 0.0
    %249 = vmatpush1.msra.mxu0 0.0
    %250 = vmatprep.subr.mxu0 0.0
    %251 = vmatpush1.msra.mxu0 0.0
    %252 = vmatprep.subr.mxu0 0.0
    %253 = vmatpush1.msra.mxu0 0.0
    %254 = vmatprep.subr.mxu0 0.0
    %255 = vmatpush1.msra.mxu0 0.0
    %256 = vmatprep.subr.mxu0 0.0
    %257 = vmatpush1.msra.mxu0 0.0
    %258 = vmatprep.subr.mxu0 0.0
    %259 = vmatpush1.msra.mxu0 0.0
    %260 = vmatprep.subr.mxu0 0.0
    %261 = vmatpush1.msra.mxu0 %v229
    %262 = vmatprep.subr.mxu0 0.0
    %263 = vmatpush1.msra.mxu0 %v228
    %264 = vmatprep.subr.mxu0 0.0
    %265 = vmatpush1.msra.mxu0 %v227
    %266 = vmatprep.subr.mxu0 0.0
    %267 = vmatpush1.msra.mxu0 %v226
    %268 = vmatprep.subr.mxu0 0.0
    %269 = vmatpush1.msra.mxu0 %v225
    %270 = vmatprep.subr.mxu0 0.0
    %271 = vmatpush1.msra.mxu0 %v224
    %272 = vmatprep.subr.mxu0 0.0
    %273 = vmatpush1.msra.mxu0 %v223
    %274 = vmatprep.subr.mxu0 0.0
    %275 = vmatpush1.msra.mxu0 %v222
    %276 = vmatprep.subr.mxu0 0.0
    %277 = vmatpush2.msra.mxu0 0.0
    %278 = vmatprep.subr.mxu0 0.0
    %279 = vmatpush2.msra.mxu0 0.0
    %280 = vmatprep.subr.mxu0 0.0
    %281 = vmatpush2.msra.mxu0 0.0
    %282 = vmatprep.subr.mxu0 0.0
    %283 = vmatpush2.msra.mxu0 0.0
    %284 = vmatprep.subr.mxu0 0.0
    %285 = vmatpush2.msra.mxu0 0.0
    %286 = vmatprep.subr.mxu0 0.0
    %287 = vmatpush2.msra.mxu0 0.0
    %288 = vmatprep.subr.mxu0 0.0
    %289 = vmatpush2.msra.mxu0 0.0
    %290 = vmatprep.subr.mxu0 0.0
    %291 = vmatpush2.msra.mxu0 0.0
    %292 = vmatprep.subr.mxu0 0.0
    %293 = vmatpush2.msra.mxu0 0.0
    %294 = vmatprep.subr.mxu0 0.0
    %295 = vmatpush2.msra.mxu0 0.0
    %296 = vmatprep.subr.mxu0 0.0
    %297 = vmatpush2.msra.mxu0 0.0
    %298 = vmatprep.subr.mxu0 0.0
    %299 = vmatpush2.msra.mxu0 0.0
    %300 = vmatprep.subr.mxu0 0.0
    %301 = vmatpush2.msra.mxu0 0.0
    %302 = vmatprep.subr.mxu0 0.0
    %303 = vmatpush2.msra.mxu0 0.0
    %304 = vmatprep.subr.mxu0 0.0
    %305 = vmatpush2.msra.mxu0 0.0
    %306 = vmatprep.subr.mxu0 0.0
    %307 = vmatpush2.msra.mxu0 0.0
    %308 = vmatprep.mubr.f32.mxu0 0.0
    %309 = vmatmul.mubr.f32.gmra.mxu0 %v239
    %v310 = vpop.f32.mrf.mxu0
    %v311 = vadd.f32 %v235, %v310
    %v312 = vpop.f32.mrf.mxu0
    %313 = vmatprep.mubr.f32.mxu0 0.0
    %314 = vmatmul.mubr.f32.gmra.mxu0 %v242
    %v315 = vpop.f32.mrf.mxu0
    %v316 = vadd.f32 %v235, %v315
    %v317 = vpop.f32.mrf.mxu0
    %318 = vdwg.mxu0
    %vm319 = vcmp.gt.f32.partialorder %v311, 0.0
    %vm320 = vcmp.gt.f32.partialorder %v316, 0.0
    %v321 = vmul.f32 %v311, 0.2
    %v322 = vmul.f32 %v316, 0.2
    %v323 = vsel %vm319, %v311, %v321
    %v324 = vsel %vm320, %v316, %v322
    %v325 = vld [vmem:[%s8] sm:$0x1]
    %v327 = vlaneseq
    %v328 = vshrl.u32 %v327, 7
    %v329 = vsub.s32 0, %v328
    %v330 = vrot.slane %v325, %v329
    %v332 = vmul.f32 %v323, %v330
    %v333 = vmul.f32 %v324, %v330
    %v334 = vsel %vm56, %v332, 0.0
    %335 = vadd.xlane.f32.xlu0 %v334
    %v336 = vpop.xlane.xlu0 %335
    %v337 = vsel %vm56, %v333, 0.0
    %338 = vadd.xlane.f32.xlu0 %v337
    %v339 = vpop.xlane.xlu0 %338
    %v340 = vld [vmem:[#allocation3] sm:$0x1]
    %v342 = vlaneseq
    %v343 = vshrl.u32 %v342, 7
    %v344 = vsub.s32 0, %v343
    %v345 = vrot.slane %v340, %v344
    %v347 = vadd.f32 %v336, %v345
    %v348 = vadd.f32 %v339, %v345
    %v349 = vlaneseq
    %v350 = vshrl.u32 %v349, 7
    %v351 = vadd.s32 %v350, 8
    %vm352 = vcmp.lt.s32.totalorder %v350, 8
    %vm353 = vcmp.lt.s32.totalorder %v351, 8
    %v354 = vsub.f32 0.0, %v347
    %v355 = vsub.f32 0.0, %v348
    %v356 = vsel %vm352, %v347, %v354
    %v357 = vsel %vm353, %v348, %v355
    %v358 = vmax.f32 %v356, 0.0
    %v359 = vmax.f32 %v357, 0.0
    %v360 = vand.u32 2147483647, %v356
    %v361 = vand.u32 2147483647, %v357
    %v362 = vsub.f32 0.0, %v360
    %v363 = vsub.f32 0.0, %v361
    %v364 = vmul.f32 %v362, 1.442695
    %v365 = vpow.pop %v364
    %v366 = vmul.f32 %v363, 1.442695
    %v367 = vpow.pop %v366
    %v368 = vadd.f32 %v365, 1.0
    %v369 = vlog2.pop %v368
    %v370 = vmul.f32 %v369, 0.6931472
    %v371 = vmul.f32 -0.5, %v365
    %v372 = vadd.f32 %v371, 1.0
    %v373 = vmul.f32 %v372, %v365
    %v374 = vand.u32 2147483647, %v365
    %vm375 = vcmp.lt.f32.partialorder %v374, 0.0004427343
    %v376 = vsel %vm375, %v373, %v370
    %v377 = vadd.f32 %v367, 1.0
    %v378 = vlog2.pop %v377
    %v379 = vmul.f32 %v378, 0.6931472
    %v380 = vmul.f32 -0.5, %v367
    %v381 = vadd.f32 %v380, 1.0
    %v382 = vmul.f32 %v381, %v367
    %v383 = vand.u32 2147483647, %v367
    %vm384 = vcmp.lt.f32.partialorder %v383, 0.0004427343
    %v385 = vsel %vm384, %v382, %v379
    %v386 = vadd.f32 %v358, %v376
    %v387 = vadd.f32 %v359, %v385
    %vm388 = vcmask 7168
    %v389 = vsel %vm388, %v386, 0.0
    %v390 = vsel %vm388, %v387, 0.0
    %v391 = vadd.f32 %v389, %v390
    %392 = vadd.xlane.f32.xlu0 %v391
    %v393 = vpop.xlane.xlu0 %392
    %v394 = vrot.slane %v393, 4
    %v395 = vadd.f32 %v393, %v394
    %v396 = vrot.slane %v395, 2
    %v397 = vadd.f32 %v395, %v396
    %v398 = vrot.slane %v397, 1
    %v399 = vadd.f32 %v397, %v398
    %s400 = vtos %v399
    %s401 = sld [smem:[#allocation2]]
    %s402 = sadd.f32 %s401, %s400
    %s403 = scalar_lea.smem [#allocation2], 0
    %404 = sst [smem:[%s403]] %s402
    // Predicated region
    $region46: #{tpu_custom_call.1} parent=1 // pred_check
      %p405 = pneg %p38
    $region47: #{tpu_custom_call.1} parent=1 // pred_check_branch
      %407 = sbr.rel (%p405) target = $region49
    $region48: #{tpu_custom_call.1} parent=1 // pred_region
      %s408 = sld [smem:[#allocation2]]
      %v409 = vrcp.pop 16.0
      %s410 = vtos %v409
      %s411 = smul.f32 %s408, %s410
      %s412 = scalar_lea.smem [#allocation4], 0
      %413 = sst [smem:[%s412]] %s411
    $region49: #{tpu_custom_call.1} parent=1 // pred_fallthru
      _
    // Predicated region
    $region50: #{tpu_custom_call.1} parent=1 // pred_check
      _
    $region51: #{tpu_custom_call.1} parent=1 // pred_check_branch
      %415 = sbr.rel (0) target = $region53
    $region52: #{tpu_custom_call.1} parent=1 // pred_region
      %s417 = ssub.s32 16, 16
      %418 = vsyncadd [#allocation5], %s417
      %421 = dma.smem_to_hbm [#allocation4], 16, %s10, [#allocation5]
    $region53: #{tpu_custom_call.1} parent=1 // pred_fallthru
      _
    // Predicated region
    $region54: #{tpu_custom_call.1} parent=1 // pred_check
      _
    $region55: #{tpu_custom_call.1} parent=1 // pred_check_branch
      %423 = sbr.rel (0) target = $region57
    $region56: #{tpu_custom_call.1} parent=1 // pred_region
      %424 = dma.done [#allocation5], 16
    $region57: #{tpu_custom_call.1} parent=1 // pred_fallthru
      _
    %425 = sfence
    %426 = vsyncpa [#allocation5], 1

</llo_original>
